<compile_context>
chip_gen: v6e
topology: v6e:2x2x1
jax: 0.10.0
libtpu: 0.0.40
codegen_flags: <defaults>
</compile_context>

<pallas_src>
import functools

import jax
import jax.numpy as jnp
from jax.experimental import pallas as pl
from jax.experimental.pallas import tpu as pltpu


def lstm_last_linear_kernel(x_ref, wih_ref, whh_ref, b_ref,
                            wout_ref, bout_ref, o_ref, gx_ref, *, T, BP, H):
    # Hoisted, time-independent input projection for all timesteps in one MXU
    # call.  Staged in VMEM scratch so the unrolled recurrence below does not
    # pin 16 vregs for the whole region.
    gx_ref[...] = (jnp.dot(x_ref[...], wih_ref[...],
                           preferred_element_type=jnp.float32)
                   + b_ref[...])

    h = jnp.zeros((BP, H), jnp.float32)
    c = jnp.zeros((BP, H), jnp.float32)

    # Statically unrolled recurrence (T is small & static).  Only the h @ W_hh
    # matmul sits on the serial dependency chain; W_hh stays in VMEM (the MXU
    # reads the RHS from there, no vreg pinning), and the per-step gate slab is
    # a sublane-aligned static slice of the scratch buffer.
    for t in range(T):
        gates = gx_ref[t * BP:(t + 1) * BP, :] + jnp.dot(
            h, whh_ref[...], preferred_element_type=jnp.float32)    # (BP, 4H)

        # Single full-width EUP pass.  g-gate columns were pre-scaled by 2 in
        # the wrapper, so tanh(z_g) == 2*sigmoid(2*z_g) - 1 comes out of the
        # same sigmoid slab with two cheap VPU ops.
        sig = jax.nn.sigmoid(gates)
        i_g = sig[:, 0 * H:1 * H]
        f_g = sig[:, 1 * H:2 * H]
        g_g = 2.0 * sig[:, 2 * H:3 * H] - 1.0
        o_g = sig[:, 3 * H:4 * H]

        c = f_g * c + i_g * g_g
        h = o_g * jnp.tanh(c)          # small (BP, H) tanh, unavoidable

    # Final linear layer on the last timestep's hidden state (padded rows are
    # garbage-but-finite; the wrapper slices them off).
    o_ref[...] = (jnp.dot(h, wout_ref[...],
                          preferred_element_type=jnp.float32)
                  + bout_ref[...])


def mh_lstm_forward(x_btd, w_ih, w_hh, b_ih, b_hh, w_out, b_out):
    """x_btd: (B, T, D) float32 (PyTorch batch_first). Returns (B, 10)."""
    B, T, D = x_btd.shape
    H = w_hh.shape[1]
    n_out = w_out.shape[0]
    BP = ((B + 7) // 8) * 8            # pad batch to a full sublane group

    # PyTorch-style params -> kernel layout.
    x_tbd = jnp.transpose(x_btd, (1, 0, 2)).astype(jnp.float32)   # (T, B, D)
    x_tbd = jnp.pad(x_tbd, ((0, 0), (0, BP - B), (0, 0)))         # zero rows
    x_flat = x_tbd.reshape(T * BP, D)

    wih_t = jnp.transpose(w_ih).astype(jnp.float32)  # (D, 4H)
    whh_t = jnp.transpose(w_hh).astype(jnp.float32)  # (H, 4H)
    b = (b_ih + b_hh).reshape(1, -1).astype(jnp.float32)   # (1, 4H)

    # Pre-scale the g-gate (3rd) chunk by 2 so the kernel needs only one
    # full-width sigmoid per step: tanh(z) = 2*sigmoid(2z) - 1.
    gscale = jnp.concatenate([jnp.ones((2 * H,), jnp.float32),
                              jnp.full((H,), 2.0, jnp.float32),
                              jnp.ones((H,), jnp.float32)])
    wih_t = wih_t * gscale
    whh_t = whh_t * gscale
    b = b * gscale

    wout_t = jnp.transpose(w_out).astype(jnp.float32)        # (H, 10)
    bout = b_out.reshape(1, -1).astype(jnp.float32)           # (1, 10)

    kernel = functools.partial(lstm_last_linear_kernel, T=T, BP=BP, H=H)
    vmem = pl.BlockSpec(memory_space=pltpu.MemorySpace.VMEM)
    out_pad = pl.pallas_call(
        kernel,
        out_shape=jax.ShapeDtypeStruct((BP, n_out), jnp.float32),
        in_specs=[vmem] * 6,
        out_specs=vmem,
        scratch_shapes=[pltpu.VMEM((T * BP, 4 * H), jnp.float32)],
    )(x_flat, wih_t, whh_t, b, wout_t, bout)
    return out_pad[:B]


def _reference_forward(x_btd, w_ih, w_hh, b_ih, b_hh, w_out, b_out):
    """Pure-JAX reference replicating PyTorch nn.LSTM + Linear semantics."""
    B, T, D = x_btd.shape
    H = w_hh.shape[1]
    h = jnp.zeros((B, H), jnp.float32)
    c = jnp.zeros((B, H), jnp.float32)
    for t in range(T):
        gates = x_btd[:, t, :] @ w_ih.T + h @ w_hh.T + b_ih + b_hh
        i_g = jax.nn.sigmoid(gates[:, 0 * H:1 * H])
        f_g = jax.nn.sigmoid(gates[:, 1 * H:2 * H])
        g_g = jnp.tanh(gates[:, 2 * H:3 * H])
        o_g = jax.nn.sigmoid(gates[:, 3 * H:4 * H])
        c = f_g * c + i_g * g_g
        h = o_g * jnp.tanh(c)
    return h @ w_out.T + b_out


if __name__ == "__main__":
    B, T, D, H, OUT = 2, 8, 28, 64, 10

    key = jax.random.PRNGKey(0)
    ks = jax.random.split(key, 7)
    scale = 1.0 / jnp.sqrt(jnp.float32(H))   # PyTorch LSTM/Linear uniform bound

    x = jax.random.normal(ks[0], (B, T, D), dtype=jnp.float32)
    w_ih = jax.random.uniform(ks[1], (4 * H, D), jnp.float32, -scale, scale)
    w_hh = jax.random.uniform(ks[2], (4 * H, H), jnp.float32, -scale, scale)
    b_ih = jax.random.uniform(ks[3], (4 * H,), jnp.float32, -scale, scale)
    b_hh = jax.random.uniform(ks[4], (4 * H,), jnp.float32, -scale, scale)
    w_out = jax.random.uniform(ks[5], (OUT, H), jnp.float32, -scale, scale)
    b_out = jax.random.uniform(ks[6], (OUT,), jnp.float32, -scale, scale)

    out = mh_lstm_forward(x, w_ih, w_hh, b_ih, b_hh, w_out, b_out)
    out = jax.block_until_ready(out)

    ref = _reference_forward(x, w_ih, w_hh, b_ih, b_hh, w_out, b_out)
    assert out.shape == (B, OUT)
    assert jnp.allclose(out, ref, atol=1e-4, rtol=1e-4)

    print("KERNEL_OK")
</pallas_src>

<mosaic_0001>
module attributes {stable_mosaic.version = 11 : i64} {
  func.func @lstm_last_linear_kernel(%arg0: memref<64x28xf32, #tpu.memory_space<vmem>>, %arg1: memref<28x256xf32, #tpu.memory_space<vmem>>, %arg2: memref<64x256xf32, #tpu.memory_space<vmem>>, %arg3: memref<1x256xf32, #tpu.memory_space<vmem>>, %arg4: memref<64x10xf32, #tpu.memory_space<vmem>>, %arg5: memref<1x10xf32, #tpu.memory_space<vmem>>, %arg6: memref<8x10xf32, #tpu.memory_space<vmem>>, %arg7: memref<64x256xf32, #tpu.memory_space<vmem>>) attributes {dimension_semantics = [], scalar_prefetch = 0 : i64, scratch_operands = 1 : i64, tpu.core_type = #tpu.core_type<tc>} {
    %c0 = arith.constant 0 : index
    %c0_0 = arith.constant 0 : index
    %0 = vector.load %arg0[%c0, %c0_0] : memref<64x28xf32, #tpu.memory_space<vmem>>, vector<64x28xf32>
    %c0_1 = arith.constant 0 : index
    %c0_2 = arith.constant 0 : index
    %1 = vector.load %arg1[%c0_1, %c0_2] : memref<28x256xf32, #tpu.memory_space<vmem>>, vector<28x256xf32>
    %cst = arith.constant dense<0.000000e+00> : vector<64x256xf32>
    %2 = tpu.matmul %0, %1, %cst {dimension_numbers = #tpu.dot_dimension_numbers<[1], [0], [0], [1], [0, 0, 1, 1], [], []>} : vector<64x28xf32>, vector<28x256xf32>, vector<64x256xf32> -> vector<64x256xf32>
    %c0_3 = arith.constant 0 : index
    %c0_4 = arith.constant 0 : index
    %3 = vector.load %arg3[%c0_3, %c0_4] : memref<1x256xf32, #tpu.memory_space<vmem>>, vector<1x256xf32>
    %4 = vector.broadcast %3 : vector<1x256xf32> to vector<64x256xf32>
    %5 = arith.addf %2, %4 : vector<64x256xf32>
    %c0_5 = arith.constant 0 : index
    %c0_6 = arith.constant 0 : index
    %6 = vector.load %arg7[%c0_5, %c0_6] : memref<64x256xf32, #tpu.memory_space<vmem>>, vector<64x256xf32>
    tpu.vector_store %arg7[%c0_5, %c0_6], %5 {strides = array<i32>} : memref<64x256xf32, #tpu.memory_space<vmem>>, vector<64x256xf32>,
    %cst_7 = arith.constant 0.000000e+00 : f32
    %7 = vector.broadcast %cst_7 : f32 to vector<8x64xf32>
    %cst_8 = arith.constant 0.000000e+00 : f32
    %8 = vector.broadcast %cst_8 : f32 to vector<8x64xf32>
    %c0_9 = arith.constant 0 : index
    %c0_10 = arith.constant 0 : index
    %9 = vector.load %arg7[%c0_9, %c0_10] : memref<64x256xf32, #tpu.memory_space<vmem>>, vector<8x256xf32>
    %c0_11 = arith.constant 0 : index
    %c0_12 = arith.constant 0 : index
    %10 = vector.load %arg2[%c0_11, %c0_12] : memref<64x256xf32, #tpu.memory_space<vmem>>, vector<64x256xf32>
    %cst_13 = arith.constant dense<0.000000e+00> : vector<8x256xf32>
    %11 = tpu.matmul %7, %10, %cst_13 {dimension_numbers = #tpu.dot_dimension_numbers<[1], [0], [0], [1], [0, 0, 1, 1], [], []>} : vector<8x64xf32>, vector<64x256xf32>, vector<8x256xf32> -> vector<8x256xf32>
    %12 = arith.addf %9, %11 : vector<8x256xf32>
    %13 = arith.negf %12 : vector<8x256xf32>
    %14 = math.exp %13 : vector<8x256xf32>
    %cst_14 = arith.constant 1.000000e+00 : f32
    %15 = vector.broadcast %cst_14 : f32 to vector<8x256xf32>
    %16 = arith.addf %15, %14 : vector<8x256xf32>
    %17 = arith.divf %15, %16 : vector<8x256xf32>
    %18 = vector.extract_strided_slice %17 {offsets = [0, 0], sizes = [8, 64], strides = [1, 1]} : vector<8x256xf32> to vector<8x64xf32>
    %19 = vector.extract_strided_slice %17 {offsets = [0, 64], sizes = [8, 64], strides = [1, 1]} : vector<8x256xf32> to vector<8x64xf32>
    %20 = vector.extract_strided_slice %17 {offsets = [0, 128], sizes = [8, 64], strides = [1, 1]} : vector<8x256xf32> to vector<8x64xf32>
    %cst_15 = arith.constant 2.000000e+00 : f32
    %21 = vector.broadcast %cst_15 : f32 to vector<8x64xf32>
    %22 = arith.mulf %21, %20 : vector<8x64xf32>
    %cst_16 = arith.constant 1.000000e+00 : f32
    %23 = vector.broadcast %cst_16 : f32 to vector<8x64xf32>
    %24 = arith.subf %22, %23 : vector<8x64xf32>
    %25 = vector.extract_strided_slice %17 {offsets = [0, 192], sizes = [8, 64], strides = [1, 1]} : vector<8x256xf32> to vector<8x64xf32>
    %26 = arith.mulf %19, %8 : vector<8x64xf32>
    %27 = arith.mulf %18, %24 : vector<8x64xf32>
    %28 = arith.addf %26, %27 : vector<8x64xf32>
    %29 = math.tanh %28 : vector<8x64xf32>
    %30 = arith.mulf %25, %29 : vector<8x64xf32>
    %c8 = arith.constant 8 : index
    %c0_17 = arith.constant 0 : index
    %31 = vector.load %arg7[%c8, %c0_17] : memref<64x256xf32, #tpu.memory_space<vmem>>, vector<8x256xf32>
    %c0_18 = arith.constant 0 : index
    %c0_19 = arith.constant 0 : index
    %32 = vector.load %arg2[%c0_18, %c0_19] : memref<64x256xf32, #tpu.memory_space<vmem>>, vector<64x256xf32>
    %cst_20 = arith.constant dense<0.000000e+00> : vector<8x256xf32>
    %33 = tpu.matmul %30, %32, %cst_20 {dimension_numbers = #tpu.dot_dimension_numbers<[1], [0], [0], [1], [0, 0, 1, 1], [], []>} : vector<8x64xf32>, vector<64x256xf32>, vector<8x256xf32> -> vector<8x256xf32>
    %34 = arith.addf %31, %33 : vector<8x256xf32>
    %35 = arith.negf %34 : vector<8x256xf32>
    %36 = math.exp %35 : vector<8x256xf32>
    %cst_21 = arith.constant 1.000000e+00 : f32
    %37 = vector.broadcast %cst_21 : f32 to vector<8x256xf32>
    %38 = arith.addf %37, %36 : vector<8x256xf32>
    %39 = arith.divf %37, %38 : vector<8x256xf32>
    %40 = vector.extract_strided_slice %39 {offsets = [0, 0], sizes = [8, 64], strides = [1, 1]} : vector<8x256xf32> to vector<8x64xf32>
    %41 = vector.extract_strided_slice %39 {offsets = [0, 64], sizes = [8, 64], strides = [1, 1]} : vector<8x256xf32> to vector<8x64xf32>
    %42 = vector.extract_strided_slice %39 {offsets = [0, 128], sizes = [8, 64], strides = [1, 1]} : vector<8x256xf32> to vector<8x64xf32>
    %cst_22 = arith.constant 2.000000e+00 : f32
    %43 = vector.broadcast %cst_22 : f32 to vector<8x64xf32>
    %44 = arith.mulf %43, %42 : vector<8x64xf32>
    %cst_23 = arith.constant 1.000000e+00 : f32
    %45 = vector.broadcast %cst_23 : f32 to vector<8x64xf32>
    %46 = arith.subf %44, %45 : vector<8x64xf32>
    %47 = vector.extract_strided_slice %39 {offsets = [0, 192], sizes = [8, 64], strides = [1, 1]} : vector<8x256xf32> to vector<8x64xf32>
    %48 = arith.mulf %41, %28 : vector<8x64xf32>
    %49 = arith.mulf %40, %46 : vector<8x64xf32>
    %50 = arith.addf %48, %49 : vector<8x64xf32>
    %51 = math.tanh %50 : vector<8x64xf32>
    %52 = arith.mulf %47, %51 : vector<8x64xf32>
    %c16 = arith.constant 16 : index
    %c0_24 = arith.constant 0 : index
    %53 = vector.load %arg7[%c16, %c0_24] : memref<64x256xf32, #tpu.memory_space<vmem>>, vector<8x256xf32>
    %c0_25 = arith.constant 0 : index
    %c0_26 = arith.constant 0 : index
    %54 = vector.load %arg2[%c0_25, %c0_26] : memref<64x256xf32, #tpu.memory_space<vmem>>, vector<64x256xf32>
    %cst_27 = arith.constant dense<0.000000e+00> : vector<8x256xf32>
    %55 = tpu.matmul %52, %54, %cst_27 {dimension_numbers = #tpu.dot_dimension_numbers<[1], [0], [0], [1], [0, 0, 1, 1], [], []>} : vector<8x64xf32>, vector<64x256xf32>, vector<8x256xf32> -> vector<8x256xf32>
    %56 = arith.addf %53, %55 : vector<8x256xf32>
    %57 = arith.negf %56 : vector<8x256xf32>
    %58 = math.exp %57 : vector<8x256xf32>
    %cst_28 = arith.constant 1.000000e+00 : f32
    %59 = vector.broadcast %cst_28 : f32 to vector<8x256xf32>
    %60 = arith.addf %59, %58 : vector<8x256xf32>
    %61 = arith.divf %59, %60 : vector<8x256xf32>
    %62 = vector.extract_strided_slice %61 {offsets = [0, 0], sizes = [8, 64], strides = [1, 1]} : vector<8x256xf32> to vector<8x64xf32>
    %63 = vector.extract_strided_slice %61 {offsets = [0, 64], sizes = [8, 64], strides = [1, 1]} : vector<8x256xf32> to vector<8x64xf32>
    %64 = vector.extract_strided_slice %61 {offsets = [0, 128], sizes = [8, 64], strides = [1, 1]} : vector<8x256xf32> to vector<8x64xf32>
    %cst_29 = arith.constant 2.000000e+00 : f32
    %65 = vector.broadcast %cst_29 : f32 to vector<8x64xf32>
    %66 = arith.mulf %65, %64 : vector<8x64xf32>
    %cst_30 = arith.constant 1.000000e+00 : f32
    %67 = vector.broadcast %cst_30 : f32 to vector<8x64xf32>
    %68 = arith.subf %66, %67 : vector<8x64xf32>
    %69 = vector.extract_strided_slice %61 {offsets = [0, 192], sizes = [8, 64], strides = [1, 1]} : vector<8x256xf32> to vector<8x64xf32>
    %70 = arith.mulf %63, %50 : vector<8x64xf32>
    %71 = arith.mulf %62, %68 : vector<8x64xf32>
    %72 = arith.addf %70, %71 : vector<8x64xf32>
    %73 = math.tanh %72 : vector<8x64xf32>
    %74 = arith.mulf %69, %73 : vector<8x64xf32>
    %c24 = arith.constant 24 : index
    %c0_31 = arith.constant 0 : index
    %75 = vector.load %arg7[%c24, %c0_31] : memref<64x256xf32, #tpu.memory_space<vmem>>, vector<8x256xf32>
    %c0_32 = arith.constant 0 : index
    %c0_33 = arith.constant 0 : index
    %76 = vector.load %arg2[%c0_32, %c0_33] : memref<64x256xf32, #tpu.memory_space<vmem>>, vector<64x256xf32>
    %cst_34 = arith.constant dense<0.000000e+00> : vector<8x256xf32>
    %77 = tpu.matmul %74, %76, %cst_34 {dimension_numbers = #tpu.dot_dimension_numbers<[1], [0], [0], [1], [0, 0, 1, 1], [], []>} : vector<8x64xf32>, vector<64x256xf32>, vector<8x256xf32> -> vector<8x256xf32>
    %78 = arith.addf %75, %77 : vector<8x256xf32>
    %79 = arith.negf %78 : vector<8x256xf32>
    %80 = math.exp %79 : vector<8x256xf32>
    %cst_35 = arith.constant 1.000000e+00 : f32
    %81 = vector.broadcast %cst_35 : f32 to vector<8x256xf32>
    %82 = arith.addf %81, %80 : vector<8x256xf32>
    %83 = arith.divf %81, %82 : vector<8x256xf32>
    %84 = vector.extract_strided_slice %83 {offsets = [0, 0], sizes = [8, 64], strides = [1, 1]} : vector<8x256xf32> to vector<8x64xf32>
    %85 = vector.extract_strided_slice %83 {offsets = [0, 64], sizes = [8, 64], strides = [1, 1]} : vector<8x256xf32> to vector<8x64xf32>
    %86 = vector.extract_strided_slice %83 {offsets = [0, 128], sizes = [8, 64], strides = [1, 1]} : vector<8x256xf32> to vector<8x64xf32>
    %cst_36 = arith.constant 2.000000e+00 : f32
    %87 = vector.broadcast %cst_36 : f32 to vector<8x64xf32>
    %88 = arith.mulf %87, %86 : vector<8x64xf32>
    %cst_37 = arith.constant 1.000000e+00 : f32
    %89 = vector.broadcast %cst_37 : f32 to vector<8x64xf32>
    %90 = arith.subf %88, %89 : vector<8x64xf32>
    %91 = vector.extract_strided_slice %83 {offsets = [0, 192], sizes = [8, 64], strides = [1, 1]} : vector<8x256xf32> to vector<8x64xf32>
    %92 = arith.mulf %85, %72 : vector<8x64xf32>
    %93 = arith.mulf %84, %90 : vector<8x64xf32>
    %94 = arith.addf %92, %93 : vector<8x64xf32>
    %95 = math.tanh %94 : vector<8x64xf32>
    %96 = arith.mulf %91, %95 : vector<8x64xf32>
    %c32 = arith.constant 32 : index
    %c0_38 = arith.constant 0 : index
    %97 = vector.load %arg7[%c32, %c0_38] : memref<64x256xf32, #tpu.memory_space<vmem>>, vector<8x256xf32>
    %c0_39 = arith.constant 0 : index
    %c0_40 = arith.constant 0 : index
    %98 = vector.load %arg2[%c0_39, %c0_40] : memref<64x256xf32, #tpu.memory_space<vmem>>, vector<64x256xf32>
    %cst_41 = arith.constant dense<0.000000e+00> : vector<8x256xf32>
    %99 = tpu.matmul %96, %98, %cst_41 {dimension_numbers = #tpu.dot_dimension_numbers<[1], [0], [0], [1], [0, 0, 1, 1], [], []>} : vector<8x64xf32>, vector<64x256xf32>, vector<8x256xf32> -> vector<8x256xf32>
    %100 = arith.addf %97, %99 : vector<8x256xf32>
    %101 = arith.negf %100 : vector<8x256xf32>
    %102 = math.exp %101 : vector<8x256xf32>
    %cst_42 = arith.constant 1.000000e+00 : f32
    %103 = vector.broadcast %cst_42 : f32 to vector<8x256xf32>
    %104 = arith.addf %103, %102 : vector<8x256xf32>
    %105 = arith.divf %103, %104 : vector<8x256xf32>
    %106 = vector.extract_strided_slice %105 {offsets = [0, 0], sizes = [8, 64], strides = [1, 1]} : vector<8x256xf32> to vector<8x64xf32>
    %107 = vector.extract_strided_slice %105 {offsets = [0, 64], sizes = [8, 64], strides = [1, 1]} : vector<8x256xf32> to vector<8x64xf32>
    %108 = vector.extract_strided_slice %105 {offsets = [0, 128], sizes = [8, 64], strides = [1, 1]} : vector<8x256xf32> to vector<8x64xf32>
    %cst_43 = arith.constant 2.000000e+00 : f32
    %109 = vector.broadcast %cst_43 : f32 to vector<8x64xf32>
    %110 = arith.mulf %109, %108 : vector<8x64xf32>
    %cst_44 = arith.constant 1.000000e+00 : f32
    %111 = vector.broadcast %cst_44 : f32 to vector<8x64xf32>
    %112 = arith.subf %110, %111 : vector<8x64xf32>
    %113 = vector.extract_strided_slice %105 {offsets = [0, 192], sizes = [8, 64], strides = [1, 1]} : vector<8x256xf32> to vector<8x64xf32>
    %114 = arith.mulf %107, %94 : vector<8x64xf32>
    %115 = arith.mulf %106, %112 : vector<8x64xf32>
    %116 = arith.addf %114, %115 : vector<8x64xf32>
    %117 = math.tanh %116 : vector<8x64xf32>
    %118 = arith.mulf %113, %117 : vector<8x64xf32>
    %c40 = arith.constant 40 : index
    %c0_45 = arith.constant 0 : index
    %119 = vector.load %arg7[%c40, %c0_45] : memref<64x256xf32, #tpu.memory_space<vmem>>, vector<8x256xf32>
    %c0_46 = arith.constant 0 : index
    %c0_47 = arith.constant 0 : index
    %120 = vector.load %arg2[%c0_46, %c0_47] : memref<64x256xf32, #tpu.memory_space<vmem>>, vector<64x256xf32>
    %cst_48 = arith.constant dense<0.000000e+00> : vector<8x256xf32>
    %121 = tpu.matmul %118, %120, %cst_48 {dimension_numbers = #tpu.dot_dimension_numbers<[1], [0], [0], [1], [0, 0, 1, 1], [], []>} : vector<8x64xf32>, vector<64x256xf32>, vector<8x256xf32> -> vector<8x256xf32>
    %122 = arith.addf %119, %121 : vector<8x256xf32>
    %123 = arith.negf %122 : vector<8x256xf32>
    %124 = math.exp %123 : vector<8x256xf32>
    %cst_49 = arith.constant 1.000000e+00 : f32
    %125 = vector.broadcast %cst_49 : f32 to vector<8x256xf32>
    %126 = arith.addf %125, %124 : vector<8x256xf32>
    %127 = arith.divf %125, %126 : vector<8x256xf32>
    %128 = vector.extract_strided_slice %127 {offsets = [0, 0], sizes = [8, 64], strides = [1, 1]} : vector<8x256xf32> to vector<8x64xf32>
    %129 = vector.extract_strided_slice %127 {offsets = [0, 64], sizes = [8, 64], strides = [1, 1]} : vector<8x256xf32> to vector<8x64xf32>
    %130 = vector.extract_strided_slice %127 {offsets = [0, 128], sizes = [8, 64], strides = [1, 1]} : vector<8x256xf32> to vector<8x64xf32>
    %cst_50 = arith.constant 2.000000e+00 : f32
    %131 = vector.broadcast %cst_50 : f32 to vector<8x64xf32>
    %132 = arith.mulf %131, %130 : vector<8x64xf32>
    %cst_51 = arith.constant 1.000000e+00 : f32
    %133 = vector.broadcast %cst_51 : f32 to vector<8x64xf32>
    %134 = arith.subf %132, %133 : vector<8x64xf32>
    %135 = vector.extract_strided_slice %127 {offsets = [0, 192], sizes = [8, 64], strides = [1, 1]} : vector<8x256xf32> to vector<8x64xf32>
    %136 = arith.mulf %129, %116 : vector<8x64xf32>
    %137 = arith.mulf %128, %134 : vector<8x64xf32>
    %138 = arith.addf %136, %137 : vector<8x64xf32>
    %139 = math.tanh %138 : vector<8x64xf32>
    %140 = arith.mulf %135, %139 : vector<8x64xf32>
    %c48 = arith.constant 48 : index
    %c0_52 = arith.constant 0 : index
    %141 = vector.load %arg7[%c48, %c0_52] : memref<64x256xf32, #tpu.memory_space<vmem>>, vector<8x256xf32>
    %c0_53 = arith.constant 0 : index
    %c0_54 = arith.constant 0 : index
    %142 = vector.load %arg2[%c0_53, %c0_54] : memref<64x256xf32, #tpu.memory_space<vmem>>, vector<64x256xf32>
    %cst_55 = arith.constant dense<0.000000e+00> : vector<8x256xf32>
    %143 = tpu.matmul %140, %142, %cst_55 {dimension_numbers = #tpu.dot_dimension_numbers<[1], [0], [0], [1], [0, 0, 1, 1], [], []>} : vector<8x64xf32>, vector<64x256xf32>, vector<8x256xf32> -> vector<8x256xf32>
    %144 = arith.addf %141, %143 : vector<8x256xf32>
    %145 = arith.negf %144 : vector<8x256xf32>
    %146 = math.exp %145 : vector<8x256xf32>
    %cst_56 = arith.constant 1.000000e+00 : f32
    %147 = vector.broadcast %cst_56 : f32 to vector<8x256xf32>
    %148 = arith.addf %147, %146 : vector<8x256xf32>
    %149 = arith.divf %147, %148 : vector<8x256xf32>
    %150 = vector.extract_strided_slice %149 {offsets = [0, 0], sizes = [8, 64], strides = [1, 1]} : vector<8x256xf32> to vector<8x64xf32>
    %151 = vector.extract_strided_slice %149 {offsets = [0, 64], sizes = [8, 64], strides = [1, 1]} : vector<8x256xf32> to vector<8x64xf32>
    %152 = vector.extract_strided_slice %149 {offsets = [0, 128], sizes = [8, 64], strides = [1, 1]} : vector<8x256xf32> to vector<8x64xf32>
    %cst_57 = arith.constant 2.000000e+00 : f32
    %153 = vector.broadcast %cst_57 : f32 to vector<8x64xf32>
    %154 = arith.mulf %153, %152 : vector<8x64xf32>
    %cst_58 = arith.constant 1.000000e+00 : f32
    %155 = vector.broadcast %cst_58 : f32 to vector<8x64xf32>
    %156 = arith.subf %154, %155 : vector<8x64xf32>
    %157 = vector.extract_strided_slice %149 {offsets = [0, 192], sizes = [8, 64], strides = [1, 1]} : vector<8x256xf32> to vector<8x64xf32>
    %158 = arith.mulf %151, %138 : vector<8x64xf32>
    %159 = arith.mulf %150, %156 : vector<8x64xf32>
    %160 = arith.addf %158, %159 : vector<8x64xf32>
    %161 = math.tanh %160 : vector<8x64xf32>
    %162 = arith.mulf %157, %161 : vector<8x64xf32>
    %c56 = arith.constant 56 : index
    %c0_59 = arith.constant 0 : index
    %163 = vector.load %arg7[%c56, %c0_59] : memref<64x256xf32, #tpu.memory_space<vmem>>, vector<8x256xf32>
    %c0_60 = arith.constant 0 : index
    %c0_61 = arith.constant 0 : index
    %164 = vector.load %arg2[%c0_60, %c0_61] : memref<64x256xf32, #tpu.memory_space<vmem>>, vector<64x256xf32>
    %cst_62 = arith.constant dense<0.000000e+00> : vector<8x256xf32>
    %165 = tpu.matmul %162, %164, %cst_62 {dimension_numbers = #tpu.dot_dimension_numbers<[1], [0], [0], [1], [0, 0, 1, 1], [], []>} : vector<8x64xf32>, vector<64x256xf32>, vector<8x256xf32> -> vector<8x256xf32>
    %166 = arith.addf %163, %165 : vector<8x256xf32>
    %167 = arith.negf %166 : vector<8x256xf32>
    %168 = math.exp %167 : vector<8x256xf32>
    %cst_63 = arith.constant 1.000000e+00 : f32
    %169 = vector.broadcast %cst_63 : f32 to vector<8x256xf32>
    %170 = arith.addf %169, %168 : vector<8x256xf32>
    %171 = arith.divf %169, %170 : vector<8x256xf32>
    %172 = vector.extract_strided_slice %171 {offsets = [0, 0], sizes = [8, 64], strides = [1, 1]} : vector<8x256xf32> to vector<8x64xf32>
    %173 = vector.extract_strided_slice %171 {offsets = [0, 64], sizes = [8, 64], strides = [1, 1]} : vector<8x256xf32> to vector<8x64xf32>
    %174 = vector.extract_strided_slice %171 {offsets = [0, 128], sizes = [8, 64], strides = [1, 1]} : vector<8x256xf32> to vector<8x64xf32>
    %cst_64 = arith.constant 2.000000e+00 : f32
    %175 = vector.broadcast %cst_64 : f32 to vector<8x64xf32>
    %176 = arith.mulf %175, %174 : vector<8x64xf32>
    %cst_65 = arith.constant 1.000000e+00 : f32
    %177 = vector.broadcast %cst_65 : f32 to vector<8x64xf32>
    %178 = arith.subf %176, %177 : vector<8x64xf32>
    %179 = vector.extract_strided_slice %171 {offsets = [0, 192], sizes = [8, 64], strides = [1, 1]} : vector<8x256xf32> to vector<8x64xf32>
    %180 = arith.mulf %173, %160 : vector<8x64xf32>
    %181 = arith.mulf %172, %178 : vector<8x64xf32>
    %182 = arith.addf %180, %181 : vector<8x64xf32>
    %183 = math.tanh %182 : vector<8x64xf32>
    %184 = arith.mulf %179, %183 : vector<8x64xf32>
    %c0_66 = arith.constant 0 : index
    %c0_67 = arith.constant 0 : index
    %185 = vector.load %arg4[%c0_66, %c0_67] : memref<64x10xf32, #tpu.memory_space<vmem>>, vector<64x10xf32>
    %cst_68 = arith.constant dense<0.000000e+00> : vector<8x10xf32>
    %186 = tpu.matmul %184, %185, %cst_68 {dimension_numbers = #tpu.dot_dimension_numbers<[1], [0], [0], [1], [0, 0, 1, 1], [], []>} : vector<8x64xf32>, vector<64x10xf32>, vector<8x10xf32> -> vector<8x10xf32>
    %c0_69 = arith.constant 0 : index
    %c0_70 = arith.constant 0 : index
    %187 = vector.load %arg5[%c0_69, %c0_70] : memref<1x10xf32, #tpu.memory_space<vmem>>, vector<1x10xf32>
    %188 = vector.broadcast %187 : vector<1x10xf32> to vector<8x10xf32>
    %189 = arith.addf %186, %188 : vector<8x10xf32>
    %c0_71 = arith.constant 0 : index
    %c0_72 = arith.constant 0 : index
    %190 = vector.load %arg6[%c0_71, %c0_72] : memref<8x10xf32, #tpu.memory_space<vmem>>, vector<8x10xf32>
    tpu.vector_store %arg6[%c0_71, %c0_72], %189 {strides = array<i32>} : memref<8x10xf32, #tpu.memory_space<vmem>>, vector<8x10xf32>,
    return
  }
}

</mosaic_0001>

<llo_original>
// kernel: tpu_custom_call.1
$region0: #{tpu_custom_call.1}
  #allocation0 [shape = 'u32[]', space=smem, size = 0x4, offset = 0x4, fixed_abs, tag = 'smem constant byte address 0x4 - core index']
  #allocation1 [shape = 'u32[144,128]{1,0:T(1,128)}', space=vmem, size = 0x12000, scoped, tag = 'internal scratch']
  #allocation2 [shape = 'f32[64,256]{1,0:T(8,128)}', space=vmem, size = 0x10000, scoped, tag = 'scratch operand']
  %s0 = inlined_call_operand.vmem [shape: f32[64,28], index: 0, kind: input, shape index: {}]
  %s1 = inlined_call_operand.hbm [shape: f32[28,256], index: 1, kind: input, shape index: {}]
  %s2 = inlined_call_operand.vmem [shape: f32[64,256], index: 2, kind: input, shape index: {}]
  %s3 = inlined_call_operand.vmem [shape: f32[1,256], index: 3, kind: input, shape index: {}]
  %s4 = inlined_call_operand.vmem [shape: f32[64,10], index: 4, kind: input, shape index: {}]
  %s5 = inlined_call_operand.vmem [shape: f32[1,10], index: 5, kind: input, shape index: {}]
  %s6 = inlined_call_operand.hbm [shape: f32[8,10], index: 6, kind: output, shape index: {}]
  %s7 = sld [smem:[#allocation0]]
  $region38: #{tpu_custom_call.1} parent=0
    _
  %s9 = ssub.s32 1, %s7
  %s10 = scalar_select 0, %s9, %s7
  $region1: #{tpu_custom_call.1} parent=0
    #allocation3 [shape = 'u8[32768]{0}', space=vmem, size = 0x8000, scoped, tag = 'input window, operand 1, single buffered']
    #allocation4 [shape = 's32[1]{0}', space=sflag, size = 0x4, scoped, tag = 'scoped memory for tpu_custom_call.1']
    #allocation5 [shape = 's32[1]{0}', space=sflag, size = 0x4, scoped, tag = 'scoped memory for tpu_custom_call.1']
    #allocation6 [shape = 'u8[4096]{0}', space=vmem, size = 0x1000, scoped, tag = 'output window, operand 0, single buffered']
    %11 = vsyncpa [#allocation4], 0
    %12 = vsyncpa [#allocation5], 0
    // Predicated region
    $region2: #{tpu_custom_call.1} parent=1 // pred_check
      _
    $region3: #{tpu_custom_call.1} parent=1 // pred_check_branch
      %14 = sbr.rel (0) target = $region5
    $region4: #{tpu_custom_call.1} parent=1 // pred_region
      _
    $region5: #{tpu_custom_call.1} parent=1 // pred_fallthru
      _
    // Predicated region
    $region6: #{tpu_custom_call.1} parent=1 // pred_check
      _
    $region7: #{tpu_custom_call.1} parent=1 // pred_check_branch
      %16 = sbr.rel (0) target = $region9
    $region8: #{tpu_custom_call.1} parent=1 // pred_region
      %s18 = ssub.s32 1024, 1024
      %19 = vsyncadd [#allocation4], %s18
      %s20 = sshll.u32 [#allocation3], 4
      %s21 = int_to_ptr.vmem [resolvable:$true] %s20
      %26 = dma.hbm_to_vmem [thread:$0]  %s1, 1024, %s21, [#allocation4], 256, 256, 16
    $region9: #{tpu_custom_call.1} parent=1 // pred_fallthru
      _
    // Predicated region
    $region10: #{tpu_custom_call.1} parent=1 // pred_check
      _
    $region11: #{tpu_custom_call.1} parent=1 // pred_check_branch
      %28 = sbr.rel (0) target = $region13
    $region12: #{tpu_custom_call.1} parent=1 // pred_region
      _
    $region13: #{tpu_custom_call.1} parent=1 // pred_fallthru
      _
    // Predicated region
    $region14: #{tpu_custom_call.1} parent=1 // pred_check
      _
    $region15: #{tpu_custom_call.1} parent=1 // pred_check_branch
      %30 = sbr.rel (0) target = $region17
    $region16: #{tpu_custom_call.1} parent=1 // pred_region
      _
    $region17: #{tpu_custom_call.1} parent=1 // pred_fallthru
      _
    // Predicated region
    $region18: #{tpu_custom_call.1} parent=1 // pred_check
      _
    $region19: #{tpu_custom_call.1} parent=1 // pred_check_branch
      %32 = sbr.rel (0) target = $region21
    $region20: #{tpu_custom_call.1} parent=1 // pred_region
      _
    $region21: #{tpu_custom_call.1} parent=1 // pred_fallthru
      _
    // Predicated region
    $region22: #{tpu_custom_call.1} parent=1 // pred_check
      _
    $region23: #{tpu_custom_call.1} parent=1 // pred_check_branch
      %34 = sbr.rel (0) target = $region25
    $region24: #{tpu_custom_call.1} parent=1 // pred_region
      _
    $region25: #{tpu_custom_call.1} parent=1 // pred_fallthru
      _
    // Predicated region
    $region26: #{tpu_custom_call.1} parent=1 // pred_check
      _
    $region27: #{tpu_custom_call.1} parent=1 // pred_check_branch
      %36 = sbr.rel (0) target = $region29
    $region28: #{tpu_custom_call.1} parent=1 // pred_region
      %37 = dma.done [#allocation4], 1024
    $region29: #{tpu_custom_call.1} parent=1 // pred_fallthru
      _
    %v38 = vld [vmem:[%s0] sm:$0xff]
    %v39 = vld [vmem:[%s0 + $0x8] sm:$0xff]
    %v40 = vld [vmem:[%s0 + $0x10] sm:$0xff]
    %v41 = vld [vmem:[%s0 + $0x18] sm:$0xff]
    %v42 = vld [vmem:[%s0 + $0x20] sm:$0xff]
    %v43 = vld [vmem:[%s0 + $0x28] sm:$0xff]
    %v44 = vld [vmem:[%s0 + $0x30] sm:$0xff]
    %v45 = vld [vmem:[%s0 + $0x38] sm:$0xff]
    %v46 = vld [vmem:[#allocation3] sm:$0xff]
    %v47 = vld [vmem:[#allocation3 + $0x8] sm:$0xff]
    %v48 = vld [vmem:[#allocation3 + $0x10] sm:$0xff]
    %v49 = vld [vmem:[#allocation3 + $0x18] sm:$0xff]
    %v50 = vld [vmem:[#allocation3 + $0x20] sm:$0xff]
    %v51 = vld [vmem:[#allocation3 + $0x28] sm:$0xff]
    %v52 = vld [vmem:[#allocation3 + $0x30] sm:$0xf]
    %v53 = vld [vmem:[#allocation3 + $0x38] sm:$0xf]
    %v54 = vld [vmem:[%s3] sm:$0x3]
    %v56 = vlaneseq
    %v57 = vshrl.u32 %v56, 7
    %v58 = vsub.s32 0, %v57
    %v59 = vrot.slane %v54, %v58
    %v60 = vlaneseq
    %v61 = vshrl.u32 %v60, 7
    %v62 = vsub.s32 1, %v61
    %v63 = vrot.slane %v54, %v62
    %vm66 = vcmask 228352
    %v68 = vsel %vm66, %v38, 0
    %v71 = vsel %vm66, %v39, 0
    %v74 = vsel %vm66, %v40, 0
    %v77 = vsel %vm66, %v41, 0
    %v80 = vsel %vm66, %v42, 0
    %v83 = vsel %vm66, %v43, 0
    %v86 = vsel %vm66, %v44, 0
    %v89 = vsel %vm66, %v45, 0
    %vm91 = vcmask 1043456
    %v93 = vsel %vm91, %v52, 0
    %v96 = vsel %vm91, %v53, 0
    %98 = vmatprep.subr.mxu0 0.0
    %99 = vmatpush1.msra.mxu0 0.0
    %100 = vmatprep.subr.mxu0 0.0
    %101 = vmatpush1.msra.mxu0 0.0
    %102 = vmatprep.subr.mxu0 0.0
    %103 = vmatpush1.msra.mxu0 0.0
    %104 = vmatprep.subr.mxu0 0.0
    %105 = vmatpush1.msra.mxu0 0.0
    %106 = vmatprep.subr.mxu0 0.0
    %107 = vmatpush1.msra.mxu0 0.0
    %108 = vmatprep.subr.mxu0 0.0
    %109 = vmatpush1.msra.mxu0 0.0
    %110 = vmatprep.subr.mxu0 0.0
    %111 = vmatpush1.msra.mxu0 0.0
    %112 = vmatprep.subr.mxu0 0.0
    %113 = vmatpush1.msra.mxu0 0.0
    %114 = vmatprep.subr.mxu0 0.0
    %115 = vmatpush1.msra.mxu0 0.0
    %116 = vmatprep.subr.mxu0 0.0
    %117 = vmatpush1.msra.mxu0 0.0
    %118 = vmatprep.subr.mxu0 0.0
    %119 = vmatpush1.msra.mxu0 0.0
    %120 = vmatprep.subr.mxu0 0.0
    %121 = vmatpush1.msra.mxu0 0.0
    %122 = vmatprep.subr.mxu0 %v96
    %123 = vmatpush1.msra.mxu0 %v93
    %124 = vmatprep.subr.mxu0 %v51
    %125 = vmatpush1.msra.mxu0 %v50
    %126 = vmatprep.subr.mxu0 %v49
    %127 = vmatpush1.msra.mxu0 %v48
    %128 = vmatprep.subr.mxu0 %v47
    %129 = vmatpush1.msra.mxu0 %v46
    %130 = vmatprep.subr.mxu0 0.0
    %131 = vmatpush2.msra.mxu0 0.0
    %132 = vmatprep.subr.mxu0 0.0
    %133 = vmatpush2.msra.mxu0 0.0
    %134 = vmatprep.subr.mxu0 0.0
    %135 = vmatpush2.msra.mxu0 0.0
    %136 = vmatprep.subr.mxu0 0.0
    %137 = vmatpush2.msra.mxu0 0.0
    %138 = vmatprep.subr.mxu0 0.0
    %139 = vmatpush2.msra.mxu0 0.0
    %140 = vmatprep.subr.mxu0 0.0
    %141 = vmatpush2.msra.mxu0 0.0
    %142 = vmatprep.subr.mxu0 0.0
    %143 = vmatpush2.msra.mxu0 0.0
    %144 = vmatprep.subr.mxu0 0.0
    %145 = vmatpush2.msra.mxu0 0.0
    %146 = vmatprep.subr.mxu0 0.0
    %147 = vmatpush2.msra.mxu0 0.0
    %148 = vmatprep.subr.mxu0 0.0
    %149 = vmatpush2.msra.mxu0 0.0
    %150 = vmatprep.subr.mxu0 0.0
    %151 = vmatpush2.msra.mxu0 0.0
    %152 = vmatprep.subr.mxu0 0.0
    %153 = vmatpush2.msra.mxu0 0.0
    %154 = vmatprep.subr.mxu0 0.0
    %155 = vmatpush2.msra.mxu0 0.0
    %156 = vmatprep.subr.mxu0 0.0
    %157 = vmatpush2.msra.mxu0 0.0
    %158 = vmatprep.subr.mxu0 0.0
    %159 = vmatpush2.msra.mxu0 0.0
    %160 = vmatprep.subr.mxu0 0.0
    %161 = vmatpush2.msra.mxu0 0.0
    %162 = vmatprep.mubr.f32.mxu0 0.0
    %163 = vmatmul.mubr.f32.gmra.mxu0 %v68
    %v164 = vpop.f32.mrf.mxu0
    %v165 = vadd.f32 %v59, %v164
    %v166 = vpop.f32.mrf.mxu0
    %v167 = vadd.f32 %v63, %v166
    %168 = vmatprep.mubr.f32.mxu0 0.0
    %169 = vmatmul.mubr.f32.gmra.mxu0 %v71
    %v170 = vpop.f32.mrf.mxu0
    %v171 = vadd.f32 %v59, %v170
    %v172 = vpop.f32.mrf.mxu0
    %v173 = vadd.f32 %v63, %v172
    %174 = vmatprep.mubr.f32.mxu0 0.0
    %175 = vmatmul.mubr.f32.gmra.mxu0 %v74
    %v176 = vpop.f32.mrf.mxu0
    %v177 = vadd.f32 %v59, %v176
    %v178 = vpop.f32.mrf.mxu0
    %v179 = vadd.f32 %v63, %v178
    %180 = vmatprep.mubr.f32.mxu0 0.0
    %181 = vmatmul.mubr.f32.gmra.mxu0 %v77
    %v182 = vpop.f32.mrf.mxu0
    %v183 = vadd.f32 %v59, %v182
    %v184 = vpop.f32.mrf.mxu0
    %v185 = vadd.f32 %v63, %v184
    %186 = vmatprep.mubr.f32.mxu0 0.0
    %187 = vmatmul.mubr.f32.gmra.mxu0 %v80
    %v188 = vpop.f32.mrf.mxu0
    %v189 = vadd.f32 %v59, %v188
    %v190 = vpop.f32.mrf.mxu0
    %v191 = vadd.f32 %v63, %v190
    %192 = vmatprep.mubr.f32.mxu0 0.0
    %193 = vmatmul.mubr.f32.gmra.mxu0 %v83
    %v194 = vpop.f32.mrf.mxu0
    %v195 = vadd.f32 %v59, %v194
    %v196 = vpop.f32.mrf.mxu0
    %v197 = vadd.f32 %v63, %v196
    %198 = vmatprep.mubr.f32.mxu0 0.0
    %199 = vmatmul.mubr.f32.gmra.mxu0 %v86
    %v200 = vpop.f32.mrf.mxu0
    %v201 = vadd.f32 %v59, %v200
    %v202 = vpop.f32.mrf.mxu0
    %v203 = vadd.f32 %v63, %v202
    %204 = vmatprep.mubr.f32.mxu0 0.0
    %205 = vmatmul.mubr.f32.gmra.mxu0 %v89
    %v206 = vpop.f32.mrf.mxu0
    %v207 = vadd.f32 %v59, %v206
    %v208 = vpop.f32.mrf.mxu0
    %v209 = vadd.f32 %v63, %v208
    %210 = vdwg.mxu0
    %211 = vst [vmem:[#allocation2] sm:$0xff] %v165
    %212 = vst [vmem:[#allocation2 + $0x8] sm:$0xff] %v167
    %213 = vst [vmem:[#allocation2 + $0x10] sm:$0xff] %v171
    %214 = vst [vmem:[#allocation2 + $0x18] sm:$0xff] %v173
    %215 = vst [vmem:[#allocation2 + $0x20] sm:$0xff] %v177
    %216 = vst [vmem:[#allocation2 + $0x28] sm:$0xff] %v179
    %217 = vst [vmem:[#allocation2 + $0x30] sm:$0xff] %v183
    %218 = vst [vmem:[#allocation2 + $0x38] sm:$0xff] %v185
    %219 = vst [vmem:[#allocation2 + $0x40] sm:$0xff] %v189
    %220 = vst [vmem:[#allocation2 + $0x48] sm:$0xff] %v191
    %221 = vst [vmem:[#allocation2 + $0x50] sm:$0xff] %v195
    %222 = vst [vmem:[#allocation2 + $0x58] sm:$0xff] %v197
    %223 = vst [vmem:[#allocation2 + $0x60] sm:$0xff] %v201
    %224 = vst [vmem:[#allocation2 + $0x68] sm:$0xff] %v203
    %225 = vst [vmem:[#allocation2 + $0x70] sm:$0xff] %v207
    %226 = vst [vmem:[#allocation2 + $0x78] sm:$0xff] %v209
    %v227 = vld [vmem:[#allocation2] sm:$0xff]
    %v228 = vld [vmem:[#allocation2 + $0x8] sm:$0xff]
    %v229 = vld [vmem:[%s2] sm:$0xff]
    %v230 = vld [vmem:[%s2 + $0x8] sm:$0xff]
    %v231 = vld [vmem:[%s2 + $0x10] sm:$0xff]
    %v232 = vld [vmem:[%s2 + $0x18] sm:$0xff]
    %v233 = vld [vmem:[%s2 + $0x20] sm:$0xff]
    %v234 = vld [vmem:[%s2 + $0x28] sm:$0xff]
    %v235 = vld [vmem:[%s2 + $0x30] sm:$0xff]
    %v236 = vld [vmem:[%s2 + $0x38] sm:$0xff]
    %v237 = vld [vmem:[%s2 + $0x40] sm:$0xff]
    %v238 = vld [vmem:[%s2 + $0x48] sm:$0xff]
    %v239 = vld [vmem:[%s2 + $0x50] sm:$0xff]
    %v240 = vld [vmem:[%s2 + $0x58] sm:$0xff]
    %v241 = vld [vmem:[%s2 + $0x60] sm:$0xff]
    %v242 = vld [vmem:[%s2 + $0x68] sm:$0xff]
    %v243 = vld [vmem:[%s2 + $0x70] sm:$0xff]
    %v244 = vld [vmem:[%s2 + $0x78] sm:$0xff]
    %vm245 = vcmask 523264
    %v247 = vsel %vm245, 0.0, 0
    %249 = vmatprep.subr.mxu0 0.0
    %250 = vmatpush1.msra.mxu0 0.0
    %251 = vmatprep.subr.mxu0 0.0
    %252 = vmatpush1.msra.mxu0 0.0
    %253 = vmatprep.subr.mxu0 0.0
    %254 = vmatpush1.msra.mxu0 0.0
    %255 = vmatprep.subr.mxu0 0.0
    %256 = vmatpush1.msra.mxu0 0.0
    %257 = vmatprep.subr.mxu0 0.0
    %258 = vmatpush1.msra.mxu0 0.0
    %259 = vmatprep.subr.mxu0 0.0
    %260 = vmatpush1.msra.mxu0 0.0
    %261 = vmatprep.subr.mxu0 0.0
    %262 = vmatpush1.msra.mxu0 0.0
    %263 = vmatprep.subr.mxu0 0.0
    %264 = vmatpush1.msra.mxu0 0.0
    %265 = vmatprep.subr.mxu0 %v244
    %266 = vmatpush1.msra.mxu0 %v243
    %267 = vmatprep.subr.mxu0 %v242
    %268 = vmatpush1.msra.mxu0 %v241
    %269 = vmatprep.subr.mxu0 %v240
    %270 = vmatpush1.msra.mxu0 %v239
    %271 = vmatprep.subr.mxu0 %v238
    %272 = vmatpush1.msra.mxu0 %v237
    %273 = vmatprep.subr.mxu0 %v236
    %274 = vmatpush1.msra.mxu0 %v235
    %275 = vmatprep.subr.mxu0 %v234
    %276 = vmatpush1.msra.mxu0 %v233
    %277 = vmatprep.subr.mxu0 %v232
    %278 = vmatpush1.msra.mxu0 %v231
    %279 = vmatprep.subr.mxu0 %v230
    %280 = vmatpush1.msra.mxu0 %v229
    %281 = vmatprep.subr.mxu0 0.0
    %282 = vmatpush2.msra.mxu0 0.0
    %283 = vmatprep.subr.mxu0 0.0
    %284 = vmatpush2.msra.mxu0 0.0
    %285 = vmatprep.subr.mxu0 0.0
    %286 = vmatpush2.msra.mxu0 0.0
    %287 = vmatprep.subr.mxu0 0.0
    %288 = vmatpush2.msra.mxu0 0.0
    %289 = vmatprep.subr.mxu0 0.0
    %290 = vmatpush2.msra.mxu0 0.0
    %291 = vmatprep.subr.mxu0 0.0
    %292 = vmatpush2.msra.mxu0 0.0
    %293 = vmatprep.subr.mxu0 0.0
    %294 = vmatpush2.msra.mxu0 0.0
    %295 = vmatprep.subr.mxu0 0.0
    %296 = vmatpush2.msra.mxu0 0.0
    %297 = vmatprep.subr.mxu0 0.0
    %298 = vmatpush2.msra.mxu0 0.0
    %299 = vmatprep.subr.mxu0 0.0
    %300 = vmatpush2.msra.mxu0 0.0
    %301 = vmatprep.subr.mxu0 0.0
    %302 = vmatpush2.msra.mxu0 0.0
    %303 = vmatprep.subr.mxu0 0.0
    %304 = vmatpush2.msra.mxu0 0.0
    %305 = vmatprep.subr.mxu0 0.0
    %306 = vmatpush2.msra.mxu0 0.0
    %307 = vmatprep.subr.mxu0 0.0
    %308 = vmatpush2.msra.mxu0 0.0
    %309 = vmatprep.subr.mxu0 0.0
    %310 = vmatpush2.msra.mxu0 0.0
    %311 = vmatprep.subr.mxu0 0.0
    %312 = vmatpush2.msra.mxu0 0.0
    %313 = vmatprep.mubr.f32.mxu0 0.0
    %314 = vmatmul.mubr.f32.gmra.mxu0 %v247
    %v315 = vpop.f32.mrf.mxu0
    %v316 = vadd.f32 0.0, %v315
    %v317 = vpop.f32.mrf.mxu0
    %v318 = vadd.f32 0.0, %v317
    %319 = vdwg.mxu0
    %v320 = vadd.f32 %v227, %v316
    %v321 = vadd.f32 %v228, %v318
    %v322 = vxor.u32 %v320, 2147483648
    %v323 = vxor.u32 %v321, 2147483648
    %v324 = vmul.f32 %v322, 1.442695
    %v325 = vpow.pop %v324
    %v326 = vmul.f32 %v323, 1.442695
    %v327 = vpow.pop %v326
    %v328 = vadd.f32 %v325, 1.0
    %v329 = vadd.f32 %v327, 1.0
    %v330 = vrcp.pop %v328
    %v331 = vmul.f32 1.0, %v330
    %v332 = vrcp.pop %v329
    %v333 = vmul.f32 1.0, %v332
    %v334 = vmul.f32 %v333, 2.0
    %v335 = vsub.f32 %v334, 1.0
    %v336 = vmul.f32 %v331, 0.0
    %v337 = vmul.f32 %v331, %v335
    %339 = vrot.lane.b32.xlu0 %v337, 64
    %v340 = vpop.permute.xlu0 %339
    %v342 = vadd.f32 %v336, %v340
    %v343 = vtanh.pop %v342
    %v344 = vmul.f32 %v333, %v343
    %v345 = vld [vmem:[#allocation2 + $0x10] sm:$0xff]
    %v346 = vld [vmem:[#allocation2 + $0x18] sm:$0xff]
    %348 = vrot.lane.b32.xlu0 %v344, 64
    %v349 = vpop.permute.xlu0 %348
    %v350 = vsel %vm245, %v349, 0
    %352 = vmatprep.subr.mxu0 0.0
    %353 = vmatpush1.msra.mxu0 0.0
    %354 = vmatprep.subr.mxu0 0.0
    %355 = vmatpush1.msra.mxu0 0.0
    %356 = vmatprep.subr.mxu0 0.0
    %357 = vmatpush1.msra.mxu0 0.0
    %358 = vmatprep.subr.mxu0 0.0
    %359 = vmatpush1.msra.mxu0 0.0
    %360 = vmatprep.subr.mxu0 0.0
    %361 = vmatpush1.msra.mxu0 0.0
    %362 = vmatprep.subr.mxu0 0.0
    %363 = vmatpush1.msra.mxu0 0.0
    %364 = vmatprep.subr.mxu0 0.0
    %365 = vmatpush1.msra.mxu0 0.0
    %366 = vmatprep.subr.mxu0 0.0
    %367 = vmatpush1.msra.mxu0 0.0
    %368 = vmatprep.subr.mxu0 %v244
    %369 = vmatpush1.msra.mxu0 %v243
    %370 = vmatprep.subr.mxu0 %v242
    %371 = vmatpush1.msra.mxu0 %v241
    %372 = vmatprep.subr.mxu0 %v240
    %373 = vmatpush1.msra.mxu0 %v239
    %374 = vmatprep.subr.mxu0 %v238
    %375 = vmatpush1.msra.mxu0 %v237
    %376 = vmatprep.subr.mxu0 %v236
    %377 = vmatpush1.msra.mxu0 %v235
    %378 = vmatprep.subr.mxu0 %v234
    %379 = vmatpush1.msra.mxu0 %v233
    %380 = vmatprep.subr.mxu0 %v232
    %381 = vmatpush1.msra.mxu0 %v231
    %382 = vmatprep.subr.mxu0 %v230
    %383 = vmatpush1.msra.mxu0 %v229
    %384 = vmatprep.subr.mxu0 0.0
    %385 = vmatpush2.msra.mxu0 0.0
    %386 = vmatprep.subr.mxu0 0.0
    %387 = vmatpush2.msra.mxu0 0.0
    %388 = vmatprep.subr.mxu0 0.0
    %389 = vmatpush2.msra.mxu0 0.0
    %390 = vmatprep.subr.mxu0 0.0
    %391 = vmatpush2.msra.mxu0 0.0
    %392 = vmatprep.subr.mxu0 0.0
    %393 = vmatpush2.msra.mxu0 0.0
    %394 = vmatprep.subr.mxu0 0.0
    %395 = vmatpush2.msra.mxu0 0.0
    %396 = vmatprep.subr.mxu0 0.0
    %397 = vmatpush2.msra.mxu0 0.0
    %398 = vmatprep.subr.mxu0 0.0
    %399 = vmatpush2.msra.mxu0 0.0
    %400 = vmatprep.subr.mxu0 0.0
    %401 = vmatpush2.msra.mxu0 0.0
    %402 = vmatprep.subr.mxu0 0.0
    %403 = vmatpush2.msra.mxu0 0.0
    %404 = vmatprep.subr.mxu0 0.0
    %405 = vmatpush2.msra.mxu0 0.0
    %406 = vmatprep.subr.mxu0 0.0
    %407 = vmatpush2.msra.mxu0 0.0
    %408 = vmatprep.subr.mxu0 0.0
    %409 = vmatpush2.msra.mxu0 0.0
    %410 = vmatprep.subr.mxu0 0.0
    %411 = vmatpush2.msra.mxu0 0.0
    %412 = vmatprep.subr.mxu0 0.0
    %413 = vmatpush2.msra.mxu0 0.0
    %414 = vmatprep.subr.mxu0 0.0
    %415 = vmatpush2.msra.mxu0 0.0
    %416 = vmatprep.mubr.f32.mxu0 0.0
    %417 = vmatmul.mubr.f32.gmra.mxu0 %v350
    %v418 = vpop.f32.mrf.mxu0
    %v419 = vadd.f32 0.0, %v418
    %v420 = vpop.f32.mrf.mxu0
    %v421 = vadd.f32 0.0, %v420
    %422 = vdwg.mxu0
    %v423 = vadd.f32 %v345, %v419
    %v424 = vadd.f32 %v346, %v421
    %v425 = vxor.u32 %v423, 2147483648
    %v426 = vxor.u32 %v424, 2147483648
    %v427 = vmul.f32 %v425, 1.442695
    %v428 = vpow.pop %v427
    %v429 = vmul.f32 %v426, 1.442695
    %v430 = vpow.pop %v429
    %v431 = vadd.f32 %v428, 1.0
    %v432 = vadd.f32 %v430, 1.0
    %v433 = vrcp.pop %v431
    %v434 = vmul.f32 1.0, %v433
    %v435 = vrcp.pop %v432
    %v436 = vmul.f32 1.0, %v435
    %v437 = vmul.f32 %v436, 2.0
    %v438 = vsub.f32 %v437, 1.0
    %v439 = vmul.f32 %v434, %v342
    %v440 = vmul.f32 %v434, %v438
    %442 = vrot.lane.b32.xlu0 %v440, 64
    %v443 = vpop.permute.xlu0 %442
    %v445 = vadd.f32 %v439, %v443
    %v446 = vtanh.pop %v445
    %v447 = vmul.f32 %v436, %v446
    %v448 = vld [vmem:[#allocation2 + $0x20] sm:$0xff]
    %v449 = vld [vmem:[#allocation2 + $0x28] sm:$0xff]
    %451 = vrot.lane.b32.xlu0 %v447, 64
    %v452 = vpop.permute.xlu0 %451
    %v453 = vsel %vm245, %v452, 0
    %455 = vmatprep.subr.mxu0 0.0
    %456 = vmatpush1.msra.mxu0 0.0
    %457 = vmatprep.subr.mxu0 0.0
    %458 = vmatpush1.msra.mxu0 0.0
    %459 = vmatprep.subr.mxu0 0.0
    %460 = vmatpush1.msra.mxu0 0.0
    %461 = vmatprep.subr.mxu0 0.0
    %462 = vmatpush1.msra.mxu0 0.0
    %463 = vmatprep.subr.mxu0 0.0
    %464 = vmatpush1.msra.mxu0 0.0
    %465 = vmatprep.subr.mxu0 0.0
    %466 = vmatpush1.msra.mxu0 0.0
    %467 = vmatprep.subr.mxu0 0.0
    %468 = vmatpush1.msra.mxu0 0.0
    %469 = vmatprep.subr.mxu0 0.0
    %470 = vmatpush1.msra.mxu0 0.0
    %471 = vmatprep.subr.mxu0 %v244
    %472 = vmatpush1.msra.mxu0 %v243
    %473 = vmatprep.subr.mxu0 %v242
    %474 = vmatpush1.msra.mxu0 %v241
    %475 = vmatprep.subr.mxu0 %v240
    %476 = vmatpush1.msra.mxu0 %v239
    %477 = vmatprep.subr.mxu0 %v238
    %478 = vmatpush1.msra.mxu0 %v237
    %479 = vmatprep.subr.mxu0 %v236
    %480 = vmatpush1.msra.mxu0 %v235
    %481 = vmatprep.subr.mxu0 %v234
    %482 = vmatpush1.msra.mxu0 %v233
    %483 = vmatprep.subr.mxu0 %v232
    %484 = vmatpush1.msra.mxu0 %v231
    %485 = vmatprep.subr.mxu0 %v230
    %486 = vmatpush1.msra.mxu0 %v229
    %487 = vmatprep.subr.mxu0 0.0
    %488 = vmatpush2.msra.mxu0 0.0
    %489 = vmatprep.subr.mxu0 0.0
    %490 = vmatpush2.msra.mxu0 0.0
    %491 = vmatprep.subr.mxu0 0.0
    %492 = vmatpush2.msra.mxu0 0.0
    %493 = vmatprep.subr.mxu0 0.0
    %494 = vmatpush2.msra.mxu0 0.0
    %495 = vmatprep.subr.mxu0 0.0
    %496 = vmatpush2.msra.mxu0 0.0
    %497 = vmatprep.subr.mxu0 0.0
    %498 = vmatpush2.msra.mxu0 0.0
    %499 = vmatprep.subr.mxu0 0.0
    %500 = vmatpush2.msra.mxu0 0.0
    %501 = vmatprep.subr.mxu0 0.0
    %502 = vmatpush2.msra.mxu0 0.0
    %503 = vmatprep.subr.mxu0 0.0
    %504 = vmatpush2.msra.mxu0 0.0
    %505 = vmatprep.subr.mxu0 0.0
    %506 = vmatpush2.msra.mxu0 0.0
    %507 = vmatprep.subr.mxu0 0.0
    %508 = vmatpush2.msra.mxu0 0.0
    %509 = vmatprep.subr.mxu0 0.0
    %510 = vmatpush2.msra.mxu0 0.0
    %511 = vmatprep.subr.mxu0 0.0
    %512 = vmatpush2.msra.mxu0 0.0
    %513 = vmatprep.subr.mxu0 0.0
    %514 = vmatpush2.msra.mxu0 0.0
    %515 = vmatprep.subr.mxu0 0.0
    %516 = vmatpush2.msra.mxu0 0.0
    %517 = vmatprep.subr.mxu0 0.0
    %518 = vmatpush2.msra.mxu0 0.0
    %519 = vmatprep.mubr.f32.mxu0 0.0
    %520 = vmatmul.mubr.f32.gmra.mxu0 %v453
    %v521 = vpop.f32.mrf.mxu0
    %v522 = vadd.f32 0.0, %v521
    %v523 = vpop.f32.mrf.mxu0
    %v524 = vadd.f32 0.0, %v523
    %525 = vdwg.mxu0
    %v526 = vadd.f32 %v448, %v522
    %v527 = vadd.f32 %v449, %v524
    %v528 = vxor.u32 %v526, 2147483648
    %v529 = vxor.u32 %v527, 2147483648
    %v530 = vmul.f32 %v528, 1.442695
    %v531 = vpow.pop %v530
    %v532 = vmul.f32 %v529, 1.442695
    %v533 = vpow.pop %v532
    %v534 = vadd.f32 %v531, 1.0
    %v535 = vadd.f32 %v533, 1.0
    %v536 = vrcp.pop %v534
    %v537 = vmul.f32 1.0, %v536
    %v538 = vrcp.pop %v535
    %v539 = vmul.f32 1.0, %v538
    %v540 = vmul.f32 %v539, 2.0
    %v541 = vsub.f32 %v540, 1.0
    %v542 = vmul.f32 %v537, %v445
    %v543 = vmul.f32 %v537, %v541
    %545 = vrot.lane.b32.xlu0 %v543, 64
    %v546 = vpop.permute.xlu0 %545
    %v548 = vadd.f32 %v542, %v546
    %v549 = vtanh.pop %v548
    %v550 = vmul.f32 %v539, %v549
    %v551 = vld [vmem:[#allocation2 + $0x30] sm:$0xff]
    %v552 = vld [vmem:[#allocation2 + $0x38] sm:$0xff]
    %554 = vrot.lane.b32.xlu0 %v550, 64
    %v555 = vpop.permute.xlu0 %554
    %v556 = vsel %vm245, %v555, 0
    %558 = vmatprep.subr.mxu0 0.0
    %559 = vmatpush1.msra.mxu0 0.0
    %560 = vmatprep.subr.mxu0 0.0
    %561 = vmatpush1.msra.mxu0 0.0
    %562 = vmatprep.subr.mxu0 0.0
    %563 = vmatpush1.msra.mxu0 0.0
    %564 = vmatprep.subr.mxu0 0.0
    %565 = vmatpush1.msra.mxu0 0.0
    %566 = vmatprep.subr.mxu0 0.0
    %567 = vmatpush1.msra.mxu0 0.0
    %568 = vmatprep.subr.mxu0 0.0
    %569 = vmatpush1.msra.mxu0 0.0
    %570 = vmatprep.subr.mxu0 0.0
    %571 = vmatpush1.msra.mxu0 0.0
    %572 = vmatprep.subr.mxu0 0.0
    %573 = vmatpush1.msra.mxu0 0.0
    %574 = vmatprep.subr.mxu0 %v244
    %575 = vmatpush1.msra.mxu0 %v243
    %576 = vmatprep.subr.mxu0 %v242
    %577 = vmatpush1.msra.mxu0 %v241
    %578 = vmatprep.subr.mxu0 %v240
    %579 = vmatpush1.msra.mxu0 %v239
    %580 = vmatprep.subr.mxu0 %v238
    %581 = vmatpush1.msra.mxu0 %v237
    %582 = vmatprep.subr.mxu0 %v236
    %583 = vmatpush1.msra.mxu0 %v235
    %584 = vmatprep.subr.mxu0 %v234
    %585 = vmatpush1.msra.mxu0 %v233
    %586 = vmatprep.subr.mxu0 %v232
    %587 = vmatpush1.msra.mxu0 %v231
    %588 = vmatprep.subr.mxu0 %v230
    %589 = vmatpush1.msra.mxu0 %v229
    %590 = vmatprep.subr.mxu0 0.0
    %591 = vmatpush2.msra.mxu0 0.0
    %592 = vmatprep.subr.mxu0 0.0
    %593 = vmatpush2.msra.mxu0 0.0
    %594 = vmatprep.subr.mxu0 0.0
    %595 = vmatpush2.msra.mxu0 0.0
    %596 = vmatprep.subr.mxu0 0.0
    %597 = vmatpush2.msra.mxu0 0.0
    %598 = vmatprep.subr.mxu0 0.0
    %599 = vmatpush2.msra.mxu0 0.0
    %600 = vmatprep.subr.mxu0 0.0
    %601 = vmatpush2.msra.mxu0 0.0
    %602 = vmatprep.subr.mxu0 0.0
    %603 = vmatpush2.msra.mxu0 0.0
    %604 = vmatprep.subr.mxu0 0.0
    %605 = vmatpush2.msra.mxu0 0.0
    %606 = vmatprep.subr.mxu0 0.0
    %607 = vmatpush2.msra.mxu0 0.0
    %608 = vmatprep.subr.mxu0 0.0
    %609 = vmatpush2.msra.mxu0 0.0
    %610 = vmatprep.subr.mxu0 0.0
    %611 = vmatpush2.msra.mxu0 0.0
    %612 = vmatprep.subr.mxu0 0.0
    %613 = vmatpush2.msra.mxu0 0.0
    %614 = vmatprep.subr.mxu0 0.0
    %615 = vmatpush2.msra.mxu0 0.0
    %616 = vmatprep.subr.mxu0 0.0
    %617 = vmatpush2.msra.mxu0 0.0
    %618 = vmatprep.subr.mxu0 0.0
    %619 = vmatpush2.msra.mxu0 0.0
    %620 = vmatprep.subr.mxu0 0.0
    %621 = vmatpush2.msra.mxu0 0.0
    %622 = vmatprep.mubr.f32.mxu0 0.0
    %623 = vmatmul.mubr.f32.gmra.mxu0 %v556
    %v624 = vpop.f32.mrf.mxu0
    %v625 = vadd.f32 0.0, %v624
    %v626 = vpop.f32.mrf.mxu0
    %v627 = vadd.f32 0.0, %v626
    %628 = vdwg.mxu0
    %v629 = vadd.f32 %v551, %v625
    %v630 = vadd.f32 %v552, %v627
    %v631 = vxor.u32 %v629, 2147483648
    %v632 = vxor.u32 %v630, 2147483648
    %v633 = vmul.f32 %v631, 1.442695
    %v634 = vpow.pop %v633
    %v635 = vmul.f32 %v632, 1.442695
    %v636 = vpow.pop %v635
    %v637 = vadd.f32 %v634, 1.0
    %v638 = vadd.f32 %v636, 1.0
    %v639 = vrcp.pop %v637
    %v640 = vmul.f32 1.0, %v639
    %v641 = vrcp.pop %v638
    %v642 = vmul.f32 1.0, %v641
    %v643 = vmul.f32 %v642, 2.0
    %v644 = vsub.f32 %v643, 1.0
    %v645 = vmul.f32 %v640, %v548
    %v646 = vmul.f32 %v640, %v644
    %648 = vrot.lane.b32.xlu0 %v646, 64
    %v649 = vpop.permute.xlu0 %648
    %v651 = vadd.f32 %v645, %v649
    %v652 = vtanh.pop %v651
    %v653 = vmul.f32 %v642, %v652
    %v654 = vld [vmem:[#allocation2 + $0x40] sm:$0xff]
    %v655 = vld [vmem:[#allocation2 + $0x48] sm:$0xff]
    %657 = vrot.lane.b32.xlu0 %v653, 64
    %v658 = vpop.permute.xlu0 %657
    %v659 = vsel %vm245, %v658, 0
    %661 = vmatprep.subr.mxu0 0.0
    %662 = vmatpush1.msra.mxu0 0.0
    %663 = vmatprep.subr.mxu0 0.0
    %664 = vmatpush1.msra.mxu0 0.0
    %665 = vmatprep.subr.mxu0 0.0
    %666 = vmatpush1.msra.mxu0 0.0
    %667 = vmatprep.subr.mxu0 0.0
    %668 = vmatpush1.msra.mxu0 0.0
    %669 = vmatprep.subr.mxu0 0.0
    %670 = vmatpush1.msra.mxu0 0.0
    %671 = vmatprep.subr.mxu0 0.0
    %672 = vmatpush1.msra.mxu0 0.0
    %673 = vmatprep.subr.mxu0 0.0
    %674 = vmatpush1.msra.mxu0 0.0
    %675 = vmatprep.subr.mxu0 0.0
    %676 = vmatpush1.msra.mxu0 0.0
    %677 = vmatprep.subr.mxu0 %v244
    %678 = vmatpush1.msra.mxu0 %v243
    %679 = vmatprep.subr.mxu0 %v242
    %680 = vmatpush1.msra.mxu0 %v241
    %681 = vmatprep.subr.mxu0 %v240
    %682 = vmatpush1.msra.mxu0 %v239
    %683 = vmatprep.subr.mxu0 %v238
    %684 = vmatpush1.msra.mxu0 %v237
    %685 = vmatprep.subr.mxu0 %v236
    %686 = vmatpush1.msra.mxu0 %v235
    %687 = vmatprep.subr.mxu0 %v234
    %688 = vmatpush1.msra.mxu0 %v233
    %689 = vmatprep.subr.mxu0 %v232
    %690 = vmatpush1.msra.mxu0 %v231
    %691 = vmatprep.subr.mxu0 %v230
    %692 = vmatpush1.msra.mxu0 %v229
    %693 = vmatprep.subr.mxu0 0.0
    %694 = vmatpush2.msra.mxu0 0.0
    %695 = vmatprep.subr.mxu0 0.0
    %696 = vmatpush2.msra.mxu0 0.0
    %697 = vmatprep.subr.mxu0 0.0
    %698 = vmatpush2.msra.mxu0 0.0
    %699 = vmatprep.subr.mxu0 0.0
    %700 = vmatpush2.msra.mxu0 0.0
    %701 = vmatprep.subr.mxu0 0.0
    %702 = vmatpush2.msra.mxu0 0.0
    %703 = vmatprep.subr.mxu0 0.0
    %704 = vmatpush2.msra.mxu0 0.0
    %705 = vmatprep.subr.mxu0 0.0
    %706 = vmatpush2.msra.mxu0 0.0
    %707 = vmatprep.subr.mxu0 0.0
    %708 = vmatpush2.msra.mxu0 0.0
    %709 = vmatprep.subr.mxu0 0.0
    %710 = vmatpush2.msra.mxu0 0.0
    %711 = vmatprep.subr.mxu0 0.0
    %712 = vmatpush2.msra.mxu0 0.0
    %713 = vmatprep.subr.mxu0 0.0
    %714 = vmatpush2.msra.mxu0 0.0
    %715 = vmatprep.subr.mxu0 0.0
    %716 = vmatpush2.msra.mxu0 0.0
    %717 = vmatprep.subr.mxu0 0.0
    %718 = vmatpush2.msra.mxu0 0.0
    %719 = vmatprep.subr.mxu0 0.0
    %720 = vmatpush2.msra.mxu0 0.0
    %721 = vmatprep.subr.mxu0 0.0
    %722 = vmatpush2.msra.mxu0 0.0
    %723 = vmatprep.subr.mxu0 0.0
    %724 = vmatpush2.msra.mxu0 0.0
    %725 = vmatprep.mubr.f32.mxu0 0.0
    %726 = vmatmul.mubr.f32.gmra.mxu0 %v659
    %v727 = vpop.f32.mrf.mxu0
    %v728 = vadd.f32 0.0, %v727
    %v729 = vpop.f32.mrf.mxu0
    %v730 = vadd.f32 0.0, %v729
    %731 = vdwg.mxu0
    %v732 = vadd.f32 %v654, %v728
    %v733 = vadd.f32 %v655, %v730
    %v734 = vxor.u32 %v732, 2147483648
    %v735 = vxor.u32 %v733, 2147483648
    %v736 = vmul.f32 %v734, 1.442695
    %v737 = vpow.pop %v736
    %v738 = vmul.f32 %v735, 1.442695
    %v739 = vpow.pop %v738
    %v740 = vadd.f32 %v737, 1.0
    %v741 = vadd.f32 %v739, 1.0
    %v742 = vrcp.pop %v740
    %v743 = vmul.f32 1.0, %v742
    %v744 = vrcp.pop %v741
    %v745 = vmul.f32 1.0, %v744
    %v746 = vmul.f32 %v745, 2.0
    %v747 = vsub.f32 %v746, 1.0
    %v748 = vmul.f32 %v743, %v651
    %v749 = vmul.f32 %v743, %v747
    %751 = vrot.lane.b32.xlu0 %v749, 64
    %v752 = vpop.permute.xlu0 %751
    %v754 = vadd.f32 %v748, %v752
    %v755 = vtanh.pop %v754
    %v756 = vmul.f32 %v745, %v755
    %v757 = vld [vmem:[#allocation2 + $0x50] sm:$0xff]
    %v758 = vld [vmem:[#allocation2 + $0x58] sm:$0xff]
    %760 = vrot.lane.b32.xlu0 %v756, 64
    %v761 = vpop.permute.xlu0 %760
    %v762 = vsel %vm245, %v761, 0
    %764 = vmatprep.subr.mxu0 0.0
    %765 = vmatpush1.msra.mxu0 0.0
    %766 = vmatprep.subr.mxu0 0.0
    %767 = vmatpush1.msra.mxu0 0.0
    %768 = vmatprep.subr.mxu0 0.0
    %769 = vmatpush1.msra.mxu0 0.0
    %770 = vmatprep.subr.mxu0 0.0
    %771 = vmatpush1.msra.mxu0 0.0
    %772 = vmatprep.subr.mxu0 0.0
    %773 = vmatpush1.msra.mxu0 0.0
    %774 = vmatprep.subr.mxu0 0.0
    %775 = vmatpush1.msra.mxu0 0.0
    %776 = vmatprep.subr.mxu0 0.0
    %777 = vmatpush1.msra.mxu0 0.0
    %778 = vmatprep.subr.mxu0 0.0
    %779 = vmatpush1.msra.mxu0 0.0
    %780 = vmatprep.subr.mxu0 %v244
    %781 = vmatpush1.msra.mxu0 %v243
    %782 = vmatprep.subr.mxu0 %v242
    %783 = vmatpush1.msra.mxu0 %v241
    %784 = vmatprep.subr.mxu0 %v240
    %785 = vmatpush1.msra.mxu0 %v239
    %786 = vmatprep.subr.mxu0 %v238
    %787 = vmatpush1.msra.mxu0 %v237
    %788 = vmatprep.subr.mxu0 %v236
    %789 = vmatpush1.msra.mxu0 %v235
    %790 = vmatprep.subr.mxu0 %v234
    %791 = vmatpush1.msra.mxu0 %v233
    %792 = vmatprep.subr.mxu0 %v232
    %793 = vmatpush1.msra.mxu0 %v231
    %794 = vmatprep.subr.mxu0 %v230
    %795 = vmatpush1.msra.mxu0 %v229
    %796 = vmatprep.subr.mxu0 0.0
    %797 = vmatpush2.msra.mxu0 0.0
    %798 = vmatprep.subr.mxu0 0.0
    %799 = vmatpush2.msra.mxu0 0.0
    %800 = vmatprep.subr.mxu0 0.0
    %801 = vmatpush2.msra.mxu0 0.0
    %802 = vmatprep.subr.mxu0 0.0
    %803 = vmatpush2.msra.mxu0 0.0
    %804 = vmatprep.subr.mxu0 0.0
    %805 = vmatpush2.msra.mxu0 0.0
    %806 = vmatprep.subr.mxu0 0.0
    %807 = vmatpush2.msra.mxu0 0.0
    %808 = vmatprep.subr.mxu0 0.0
    %809 = vmatpush2.msra.mxu0 0.0
    %810 = vmatprep.subr.mxu0 0.0
    %811 = vmatpush2.msra.mxu0 0.0
    %812 = vmatprep.subr.mxu0 0.0
    %813 = vmatpush2.msra.mxu0 0.0
    %814 = vmatprep.subr.mxu0 0.0
    %815 = vmatpush2.msra.mxu0 0.0
    %816 = vmatprep.subr.mxu0 0.0
    %817 = vmatpush2.msra.mxu0 0.0
    %818 = vmatprep.subr.mxu0 0.0
    %819 = vmatpush2.msra.mxu0 0.0
    %820 = vmatprep.subr.mxu0 0.0
    %821 = vmatpush2.msra.mxu0 0.0
    %822 = vmatprep.subr.mxu0 0.0
    %823 = vmatpush2.msra.mxu0 0.0
    %824 = vmatprep.subr.mxu0 0.0
    %825 = vmatpush2.msra.mxu0 0.0
    %826 = vmatprep.subr.mxu0 0.0
    %827 = vmatpush2.msra.mxu0 0.0
    %828 = vmatprep.mubr.f32.mxu0 0.0
    %829 = vmatmul.mubr.f32.gmra.mxu0 %v762
    %v830 = vpop.f32.mrf.mxu0
    %v831 = vadd.f32 0.0, %v830
    %v832 = vpop.f32.mrf.mxu0
    %v833 = vadd.f32 0.0, %v832
    %834 = vdwg.mxu0
    %v835 = vadd.f32 %v757, %v831
    %v836 = vadd.f32 %v758, %v833
    %v837 = vxor.u32 %v835, 2147483648
    %v838 = vxor.u32 %v836, 2147483648
    %v839 = vmul.f32 %v837, 1.442695
    %v840 = vpow.pop %v839
    %v841 = vmul.f32 %v838, 1.442695
    %v842 = vpow.pop %v841
    %v843 = vadd.f32 %v840, 1.0
    %v844 = vadd.f32 %v842, 1.0
    %v845 = vrcp.pop %v843
    %v846 = vmul.f32 1.0, %v845
    %v847 = vrcp.pop %v844
    %v848 = vmul.f32 1.0, %v847
    %v849 = vmul.f32 %v848, 2.0
    %v850 = vsub.f32 %v849, 1.0
    %v851 = vmul.f32 %v846, %v754
    %v852 = vmul.f32 %v846, %v850
    %854 = vrot.lane.b32.xlu0 %v852, 64
    %v855 = vpop.permute.xlu0 %854
    %v857 = vadd.f32 %v851, %v855
    %v858 = vtanh.pop %v857
    %v859 = vmul.f32 %v848, %v858
    %v860 = vld [vmem:[#allocation2 + $0x60] sm:$0xff]
    %v861 = vld [vmem:[#allocation2 + $0x68] sm:$0xff]
    %863 = vrot.lane.b32.xlu0 %v859, 64
    %v864 = vpop.permute.xlu0 %863
    %v865 = vsel %vm245, %v864, 0
    %867 = vmatprep.subr.mxu0 0.0
    %868 = vmatpush1.msra.mxu0 0.0
    %869 = vmatprep.subr.mxu0 0.0
    %870 = vmatpush1.msra.mxu0 0.0
    %871 = vmatprep.subr.mxu0 0.0
    %872 = vmatpush1.msra.mxu0 0.0
    %873 = vmatprep.subr.mxu0 0.0
    %874 = vmatpush1.msra.mxu0 0.0
    %875 = vmatprep.subr.mxu0 0.0
    %876 = vmatpush1.msra.mxu0 0.0
    %877 = vmatprep.subr.mxu0 0.0
    %878 = vmatpush1.msra.mxu0 0.0
    %879 = vmatprep.subr.mxu0 0.0
    %880 = vmatpush1.msra.mxu0 0.0
    %881 = vmatprep.subr.mxu0 0.0
    %882 = vmatpush1.msra.mxu0 0.0
    %883 = vmatprep.subr.mxu0 %v244
    %884 = vmatpush1.msra.mxu0 %v243
    %885 = vmatprep.subr.mxu0 %v242
    %886 = vmatpush1.msra.mxu0 %v241
    %887 = vmatprep.subr.mxu0 %v240
    %888 = vmatpush1.msra.mxu0 %v239
    %889 = vmatprep.subr.mxu0 %v238
    %890 = vmatpush1.msra.mxu0 %v237
    %891 = vmatprep.subr.mxu0 %v236
    %892 = vmatpush1.msra.mxu0 %v235
    %893 = vmatprep.subr.mxu0 %v234
    %894 = vmatpush1.msra.mxu0 %v233
    %895 = vmatprep.subr.mxu0 %v232
    %896 = vmatpush1.msra.mxu0 %v231
    %897 = vmatprep.subr.mxu0 %v230
    %898 = vmatpush1.msra.mxu0 %v229
    %899 = vmatprep.subr.mxu0 0.0
    %900 = vmatpush2.msra.mxu0 0.0
    %901 = vmatprep.subr.mxu0 0.0
    %902 = vmatpush2.msra.mxu0 0.0
    %903 = vmatprep.subr.mxu0 0.0
    %904 = vmatpush2.msra.mxu0 0.0
    %905 = vmatprep.subr.mxu0 0.0
    %906 = vmatpush2.msra.mxu0 0.0
    %907 = vmatprep.subr.mxu0 0.0
    %908 = vmatpush2.msra.mxu0 0.0
    %909 = vmatprep.subr.mxu0 0.0
    %910 = vmatpush2.msra.mxu0 0.0
    %911 = vmatprep.subr.mxu0 0.0
    %912 = vmatpush2.msra.mxu0 0.0
    %913 = vmatprep.subr.mxu0 0.0
    %914 = vmatpush2.msra.mxu0 0.0
    %915 = vmatprep.subr.mxu0 0.0
    %916 = vmatpush2.msra.mxu0 0.0
    %917 = vmatprep.subr.mxu0 0.0
    %918 = vmatpush2.msra.mxu0 0.0
    %919 = vmatprep.subr.mxu0 0.0
    %920 = vmatpush2.msra.mxu0 0.0
    %921 = vmatprep.subr.mxu0 0.0
    %922 = vmatpush2.msra.mxu0 0.0
    %923 = vmatprep.subr.mxu0 0.0
    %924 = vmatpush2.msra.mxu0 0.0
    %925 = vmatprep.subr.mxu0 0.0
    %926 = vmatpush2.msra.mxu0 0.0
    %927 = vmatprep.subr.mxu0 0.0
    %928 = vmatpush2.msra.mxu0 0.0
    %929 = vmatprep.subr.mxu0 0.0
    %930 = vmatpush2.msra.mxu0 0.0
    %931 = vmatprep.mubr.f32.mxu0 0.0
    %932 = vmatmul.mubr.f32.gmra.mxu0 %v865
    %v933 = vpop.f32.mrf.mxu0
    %v934 = vadd.f32 0.0, %v933
    %v935 = vpop.f32.mrf.mxu0
    %v936 = vadd.f32 0.0, %v935
    %937 = vdwg.mxu0
    %v938 = vadd.f32 %v860, %v934
    %v939 = vadd.f32 %v861, %v936
    %v940 = vxor.u32 %v938, 2147483648
    %v941 = vxor.u32 %v939, 2147483648
    %v942 = vmul.f32 %v940, 1.442695
    %v943 = vpow.pop %v942
    %v944 = vmul.f32 %v941, 1.442695
    %v945 = vpow.pop %v944
    %v946 = vadd.f32 %v943, 1.0
    %v947 = vadd.f32 %v945, 1.0
    %v948 = vrcp.pop %v946
    %v949 = vmul.f32 1.0, %v948
    %v950 = vrcp.pop %v947
    %v951 = vmul.f32 1.0, %v950
    %v952 = vmul.f32 %v951, 2.0
    %v953 = vsub.f32 %v952, 1.0
    %v954 = vmul.f32 %v949, %v857
    %v955 = vmul.f32 %v949, %v953
    %957 = vrot.lane.b32.xlu0 %v955, 64
    %v958 = vpop.permute.xlu0 %957
    %v960 = vadd.f32 %v954, %v958
    %v961 = vtanh.pop %v960
    %v962 = vmul.f32 %v951, %v961
    %v963 = vld [vmem:[#allocation2 + $0x70] sm:$0xff]
    %v964 = vld [vmem:[#allocation2 + $0x78] sm:$0xff]
    %966 = vrot.lane.b32.xlu0 %v962, 64
    %v967 = vpop.permute.xlu0 %966
    %v968 = vsel %vm245, %v967, 0
    %970 = vmatprep.subr.mxu0 0.0
    %971 = vmatpush1.msra.mxu0 0.0
    %972 = vmatprep.subr.mxu0 0.0
    %973 = vmatpush1.msra.mxu0 0.0
    %974 = vmatprep.subr.mxu0 0.0
    %975 = vmatpush1.msra.mxu0 0.0
    %976 = vmatprep.subr.mxu0 0.0
    %977 = vmatpush1.msra.mxu0 0.0
    %978 = vmatprep.subr.mxu0 0.0
    %979 = vmatpush1.msra.mxu0 0.0
    %980 = vmatprep.subr.mxu0 0.0
    %981 = vmatpush1.msra.mxu0 0.0
    %982 = vmatprep.subr.mxu0 0.0
    %983 = vmatpush1.msra.mxu0 0.0
    %984 = vmatprep.subr.mxu0 0.0
    %985 = vmatpush1.msra.mxu0 0.0
    %986 = vmatprep.subr.mxu0 %v244
    %987 = vmatpush1.msra.mxu0 %v243
    %988 = vmatprep.subr.mxu0 %v242
    %989 = vmatpush1.msra.mxu0 %v241
    %990 = vmatprep.subr.mxu0 %v240
    %991 = vmatpush1.msra.mxu0 %v239
    %992 = vmatprep.subr.mxu0 %v238
    %993 = vmatpush1.msra.mxu0 %v237
    %994 = vmatprep.subr.mxu0 %v236
    %995 = vmatpush1.msra.mxu0 %v235
    %996 = vmatprep.subr.mxu0 %v234
    %997 = vmatpush1.msra.mxu0 %v233
    %998 = vmatprep.subr.mxu0 %v232
    %999 = vmatpush1.msra.mxu0 %v231
    %1000 = vmatprep.subr.mxu0 %v230
    %1001 = vmatpush1.msra.mxu0 %v229
    %1002 = vmatprep.subr.mxu0 0.0
    %1003 = vmatpush2.msra.mxu0 0.0
    %1004 = vmatprep.subr.mxu0 0.0
    %1005 = vmatpush2.msra.mxu0 0.0
    %1006 = vmatprep.subr.mxu0 0.0
    %1007 = vmatpush2.msra.mxu0 0.0
    %1008 = vmatprep.subr.mxu0 0.0
    %1009 = vmatpush2.msra.mxu0 0.0
    %1010 = vmatprep.subr.mxu0 0.0
    %1011 = vmatpush2.msra.mxu0 0.0
    %1012 = vmatprep.subr.mxu0 0.0
    %1013 = vmatpush2.msra.mxu0 0.0
    %1014 = vmatprep.subr.mxu0 0.0
    %1015 = vmatpush2.msra.mxu0 0.0
    %1016 = vmatprep.subr.mxu0 0.0
    %1017 = vmatpush2.msra.mxu0 0.0
    %1018 = vmatprep.subr.mxu0 0.0
    %1019 = vmatpush2.msra.mxu0 0.0
    %1020 = vmatprep.subr.mxu0 0.0
    %1021 = vmatpush2.msra.mxu0 0.0
    %1022 = vmatprep.subr.mxu0 0.0
    %1023 = vmatpush2.msra.mxu0 0.0
    %1024 = vmatprep.subr.mxu0 0.0
    %1025 = vmatpush2.msra.mxu0 0.0
    %1026 = vmatprep.subr.mxu0 0.0
    %1027 = vmatpush2.msra.mxu0 0.0
    %1028 = vmatprep.subr.mxu0 0.0
    %1029 = vmatpush2.msra.mxu0 0.0
    %1030 = vmatprep.subr.mxu0 0.0
    %1031 = vmatpush2.msra.mxu0 0.0
    %1032 = vmatprep.subr.mxu0 0.0
    %1033 = vmatpush2.msra.mxu0 0.0
    %1034 = vmatprep.mubr.f32.mxu0 0.0
    %1035 = vmatmul.mubr.f32.gmra.mxu0 %v968
    %v1036 = vpop.f32.mrf.mxu0
    %v1037 = vadd.f32 0.0, %v1036
    %v1038 = vpop.f32.mrf.mxu0
    %v1039 = vadd.f32 0.0, %v1038
    %1040 = vdwg.mxu0
    %v1041 = vadd.f32 %v963, %v1037
    %v1042 = vadd.f32 %v964, %v1039
    %v1043 = vxor.u32 %v1041, 2147483648
    %v1044 = vxor.u32 %v1042, 2147483648
    %v1045 = vmul.f32 %v1043, 1.442695
    %v1046 = vpow.pop %v1045
    %v1047 = vmul.f32 %v1044, 1.442695
    %v1048 = vpow.pop %v1047
    %v1049 = vadd.f32 %v1046, 1.0
    %v1050 = vadd.f32 %v1048, 1.0
    %v1051 = vrcp.pop %v1049
    %v1052 = vmul.f32 1.0, %v1051
    %v1053 = vrcp.pop %v1050
    %v1054 = vmul.f32 1.0, %v1053
    %v1055 = vmul.f32 %v1054, 2.0
    %v1056 = vsub.f32 %v1055, 1.0
    %v1057 = vmul.f32 %v1052, %v960
    %v1058 = vmul.f32 %v1052, %v1056
    %1060 = vrot.lane.b32.xlu0 %v1058, 64
    %v1061 = vpop.permute.xlu0 %1060
    %v1063 = vadd.f32 %v1057, %v1061
    %v1064 = vtanh.pop %v1063
    %v1065 = vmul.f32 %v1054, %v1064
    %v1066 = vld [vmem:[%s4] sm:$0xff]
    %v1067 = vld [vmem:[%s4 + $0x8] sm:$0xff]
    %v1068 = vld [vmem:[%s4 + $0x10] sm:$0xff]
    %v1069 = vld [vmem:[%s4 + $0x18] sm:$0xff]
    %v1070 = vld [vmem:[%s4 + $0x20] sm:$0xff]
    %v1071 = vld [vmem:[%s4 + $0x28] sm:$0xff]
    %v1072 = vld [vmem:[%s4 + $0x30] sm:$0xff]
    %v1073 = vld [vmem:[%s4 + $0x38] sm:$0xff]
    %v1074 = vld [vmem:[%s5] sm:$0x1]
    %v1076 = vlaneseq
    %v1077 = vshrl.u32 %v1076, 7
    %v1078 = vsub.s32 0, %v1077
    %v1079 = vrot.slane %v1074, %v1078
    %1082 = vrot.lane.b32.xlu0 %v1065, 64
    %v1083 = vpop.permute.xlu0 %1082
    %v1084 = vsel %vm245, %v1083, 0
    %1086 = vmatprep.subr.mxu0 0.0
    %1087 = vmatpush1.msra.mxu0 0.0
    %1088 = vmatprep.subr.mxu0 0.0
    %1089 = vmatpush1.msra.mxu0 0.0
    %1090 = vmatprep.subr.mxu0 0.0
    %1091 = vmatpush1.msra.mxu0 0.0
    %1092 = vmatprep.subr.mxu0 0.0
    %1093 = vmatpush1.msra.mxu0 0.0
    %1094 = vmatprep.subr.mxu0 0.0
    %1095 = vmatpush1.msra.mxu0 0.0
    %1096 = vmatprep.subr.mxu0 0.0
    %1097 = vmatpush1.msra.mxu0 0.0
    %1098 = vmatprep.subr.mxu0 0.0
    %1099 = vmatpush1.msra.mxu0 0.0
    %1100 = vmatprep.subr.mxu0 0.0
    %1101 = vmatpush1.msra.mxu0 0.0
    %1102 = vmatprep.subr.mxu0 0.0
    %1103 = vmatpush1.msra.mxu0 %v1073
    %1104 = vmatprep.subr.mxu0 0.0
    %1105 = vmatpush1.msra.mxu0 %v1072
    %1106 = vmatprep.subr.mxu0 0.0
    %1107 = vmatpush1.msra.mxu0 %v1071
    %1108 = vmatprep.subr.mxu0 0.0
    %1109 = vmatpush1.msra.mxu0 %v1070
    %1110 = vmatprep.subr.mxu0 0.0
    %1111 = vmatpush1.msra.mxu0 %v1069
    %1112 = vmatprep.subr.mxu0 0.0
    %1113 = vmatpush1.msra.mxu0 %v1068
    %1114 = vmatprep.subr.mxu0 0.0
    %1115 = vmatpush1.msra.mxu0 %v1067
    %1116 = vmatprep.subr.mxu0 0.0
    %1117 = vmatpush1.msra.mxu0 %v1066
    %1118 = vmatprep.subr.mxu0 0.0
    %1119 = vmatpush2.msra.mxu0 0.0
    %1120 = vmatprep.subr.mxu0 0.0
    %1121 = vmatpush2.msra.mxu0 0.0
    %1122 = vmatprep.subr.mxu0 0.0
    %1123 = vmatpush2.msra.mxu0 0.0
    %1124 = vmatprep.subr.mxu0 0.0
    %1125 = vmatpush2.msra.mxu0 0.0
    %1126 = vmatprep.subr.mxu0 0.0
    %1127 = vmatpush2.msra.mxu0 0.0
    %1128 = vmatprep.subr.mxu0 0.0
    %1129 = vmatpush2.msra.mxu0 0.0
    %1130 = vmatprep.subr.mxu0 0.0
    %1131 = vmatpush2.msra.mxu0 0.0
    %1132 = vmatprep.subr.mxu0 0.0
    %1133 = vmatpush2.msra.mxu0 0.0
    %1134 = vmatprep.subr.mxu0 0.0
    %1135 = vmatpush2.msra.mxu0 0.0
    %1136 = vmatprep.subr.mxu0 0.0
    %1137 = vmatpush2.msra.mxu0 0.0
    %1138 = vmatprep.subr.mxu0 0.0
    %1139 = vmatpush2.msra.mxu0 0.0
    %1140 = vmatprep.subr.mxu0 0.0
    %1141 = vmatpush2.msra.mxu0 0.0
    %1142 = vmatprep.subr.mxu0 0.0
    %1143 = vmatpush2.msra.mxu0 0.0
    %1144 = vmatprep.subr.mxu0 0.0
    %1145 = vmatpush2.msra.mxu0 0.0
    %1146 = vmatprep.subr.mxu0 0.0
    %1147 = vmatpush2.msra.mxu0 0.0
    %1148 = vmatprep.subr.mxu0 0.0
    %1149 = vmatpush2.msra.mxu0 0.0
    %1150 = vmatprep.mubr.f32.mxu0 0.0
    %1151 = vmatmul.mubr.f32.gmra.mxu0 %v1084
    %v1152 = vpop.f32.mrf.mxu0
    %v1153 = vadd.f32 %v1079, %v1152
    %v1154 = vpop.f32.mrf.mxu0
    %1155 = vdwg.mxu0
    %vm1156 = vcmask 80896
    %1157 = vst.msk [vmem:[#allocation6] sm:$0xff] %vm1156, %v1153
    // Predicated region
    $region30: #{tpu_custom_call.1} parent=1 // pred_check
      _
    $region31: #{tpu_custom_call.1} parent=1 // pred_check_branch
      %1159 = sbr.rel (0) target = $region33
    $region32: #{tpu_custom_call.1} parent=1 // pred_region
      %s1161 = ssub.s32 128, 128
      %1162 = vsyncadd [#allocation5], %s1161
      %s1164 = sshll.u32 [#allocation6], 4
      %s1165 = int_to_ptr.vmem [resolvable:$true] %s1164
      %1167 = dma.vmem_to_hbm [thread:$0]  %s1165, 128, %s6, [#allocation5]
    $region33: #{tpu_custom_call.1} parent=1 // pred_fallthru
      _
    // Predicated region
    $region34: #{tpu_custom_call.1} parent=1 // pred_check
      _
    $region35: #{tpu_custom_call.1} parent=1 // pred_check_branch
      %1169 = sbr.rel (0) target = $region37
    $region36: #{tpu_custom_call.1} parent=1 // pred_region
      %1170 = dma.done [#allocation5], 128
    $region37: #{tpu_custom_call.1} parent=1 // pred_fallthru
      _
    %1171 = vsyncpa [#allocation4], 1
    %1172 = vsyncpa [#allocation5], 1

</llo_original>
